<compile_context>
chip_gen: v7x
topology: tpu7x:2x2x1
jax: 0.10.0
libtpu: 0.0.40
codegen_flags: <defaults>
</compile_context>

<pallas_src>
import math

import jax
import jax.numpy as jnp
import numpy as np
from jax.experimental import pallas as pl
from jax.experimental.pallas import tpu as pltpu


def _round_up(x, m):
    return ((x + m - 1) // m) * m


# ----------------------------------------------------------------------------
# Gabor weight construction (parameter setup, plain JAX — mirrors __init__)
# ----------------------------------------------------------------------------
def build_gabor_weights(key, in_channels, out_channels, kernel_size):
    kh, kw = kernel_size
    delta = 1e-3

    k_freq, k_theta, k_psi = jax.random.split(key, 3)

    # freq = pi/2 * sqrt(2) ** (-randint(0, 5))
    freq_exp = jax.random.randint(k_freq, (out_channels, in_channels), 0, 5)
    freq = (math.pi / 2) * (math.sqrt(2.0) ** (-freq_exp.astype(jnp.float32)))
    # theta = pi/8 * randint(0, 8)
    theta = (math.pi / 8) * jax.random.randint(
        k_theta, (out_channels, in_channels), 0, 8
    ).astype(jnp.float32)
    sigma = math.pi / freq
    psi = math.pi * jax.random.uniform(k_psi, (out_channels, in_channels),
                                       dtype=jnp.float32)

    # Grid — matches torch.meshgrid([linspace(...), linspace(...)]) ('ij').
    x0 = math.ceil(kernel_size[0] / 2)
    y0 = math.ceil(kernel_size[1] / 2)
    lin0 = jnp.linspace(-x0 + 1, x0 + 0, kernel_size[0], dtype=jnp.float32)
    lin1 = jnp.linspace(-y0 + 1, y0 + 0, kernel_size[1], dtype=jnp.float32)
    ygrid, xgrid = jnp.meshgrid(lin0, lin1, indexing="ij")  # (KH, KW)

    f = freq[:, :, None, None]
    t = theta[:, :, None, None]
    s = sigma[:, :, None, None]
    p = psi[:, :, None, None]
    xg = xgrid[None, None, :, :]
    yg = ygrid[None, None, :, :]

    rotx = xg * jnp.cos(t) + yg * jnp.sin(t)
    roty = -xg * jnp.sin(t) + yg * jnp.cos(t)
    g = jnp.exp(-0.5 * ((rotx ** 2 + roty ** 2) / (s + delta) ** 2))
    g = g * jnp.cos(f * rotx + p)
    g = g / (2 * math.pi * s ** 2)  # (O, I, KH, KW)

    # normalize_kernels: divide by L1 norm over the flattened per-output filter.
    l1 = jnp.sum(jnp.abs(g), axis=(1, 2, 3), keepdims=True)
    return (g / l1).astype(jnp.float32)


# ----------------------------------------------------------------------------
# Wrapper-side (XLA) layout plumbing: im2col patch matrix
# ----------------------------------------------------------------------------
def _im2col_nchw(x, kh, kw):
    """(N, C, H, W) -> (K, L) with k = c*KH*KW + i*KW + j, l = n*OH*OW + oy*OW + ox."""
    n, c, h, w = x.shape
    oh, ow = h - kh + 1, w - kw + 1
    taps = [x[:, :, i:i + oh, j:j + ow] for i in range(kh) for j in range(kw)]
    p = jnp.stack(taps, axis=2)            # (N, C, KH*KW, OH, OW)
    p = jnp.transpose(p, (1, 2, 0, 3, 4))  # (C, KH*KW, N, OH, OW)
    return p.reshape(c * kh * kw, n * oh * ow)


# ----------------------------------------------------------------------------
# Pallas conv2d kernel (stride=1, padding=0, dilation=1, groups=1, no bias)
# ----------------------------------------------------------------------------
def _conv_kernel(w_ref, p_ref, o_ref):
    # w_ref: (O_pad, K_pad)   p_ref: (K_pad, L_TILE)   o_ref: (O_pad, L_TILE)
    # Single MXU contraction; zero-padded K rows/cols contribute exactly zero.
    o_ref[...] = jnp.dot(
        w_ref[...], p_ref[...],
        preferred_element_type=jnp.float32,
        precision=jax.lax.Precision.HIGHEST,
    ).astype(o_ref.dtype)


def gabor_conv2d(x, weight, *, l_tile=256):
    """x: (N, C, H, W) f32, weight: (O, C, KH, KW) f32 -> (N, O, OH, OW) f32."""
    n, c, h, w = x.shape
    o, c_w, kh, kw = weight.shape
    assert c == c_w
    oh, ow = h - kh + 1, w - kw + 1
    K = c * kh * kw
    L = n * oh * ow

    # Pad everything to clean (8,128)-tile multiples so every Pallas block is
    # lane/sublane-dense and every store is an unmasked vst.
    o_pad = _round_up(o, 8)        # sublane quantum
    k_pad = _round_up(K, 128)      # MXU-friendly contraction dim (zeros exact)
    l_pad = _round_up(L, l_tile)   # lane-dense output tiles

    patches = _im2col_nchw(x, kh, kw)                                  # (K, L)
    patches_p = jnp.zeros((k_pad, l_pad), x.dtype).at[:K, :L].set(patches)
    w_p = jnp.zeros((o_pad, k_pad), weight.dtype).at[:o, :K].set(
        weight.reshape(o, K))

    grid = (l_pad // l_tile,)
    out_p = pl.pallas_call(
        _conv_kernel,
        out_shape=jax.ShapeDtypeStruct((o_pad, l_pad), x.dtype),
        grid=grid,
        in_specs=[
            pl.BlockSpec((o_pad, k_pad), lambda l: (0, 0)),     # weights resident
            pl.BlockSpec((k_pad, l_tile), lambda l: (0, l)),    # patch tile
        ],
        out_specs=pl.BlockSpec((o_pad, l_tile), lambda l: (0, l)),
        compiler_params=pltpu.CompilerParams(
            # L axis is independent -> megacore sharding on v7x, no-op on v5e/v6e.
            dimension_semantics=("parallel",),
        ),
    )(w_p, patches_p)

    # TODO(synk): at realistic sizes also tile O (parallel) and K (trailing
    # "arbitrary" axis + VMEM scratch accumulator with pl.when init/finalize),
    # cast patches/weights to bf16 with f32 accumulation on v6e/v7x, and
    # re-budget tile sizes against per-generation VMEM (64 MiB on v7x) via
    # vmem_limit_bytes.

    # Strip padding and restore NCHW: (O, N*OH*OW) -> (N, O, OH, OW).
    out = out_p[:o, :L].reshape(o, n, oh, ow)
    return jnp.transpose(out, (1, 0, 2, 3))


# ----------------------------------------------------------------------------
# Main
# ----------------------------------------------------------------------------
if __name__ == "__main__":
    key = jax.random.PRNGKey(0)
    k_w, k_x = jax.random.split(key)

    in_channels, out_channels = 4, 8
    kernel_size = (3, 3)
    batch, spatial = 2, 16

    weight = build_gabor_weights(k_w, in_channels, out_channels, kernel_size)
    x = jax.random.normal(k_x, (batch, in_channels, spatial, spatial),
                          dtype=jnp.float32)

    out = gabor_conv2d(x, weight)
    out = jax.block_until_ready(out)

    # Reference check against XLA's conv (NCHW / OIHW, VALID padding).
    ref = jax.lax.conv_general_dilated(
        x, weight, window_strides=(1, 1), padding="VALID",
        dimension_numbers=("NCHW", "OIHW", "NCHW"),
        precision=jax.lax.Precision.HIGHEST,
    )
    np.testing.assert_allclose(np.asarray(out), np.asarray(ref),
                               rtol=1e-3, atol=1e-5)

    assert out.shape == (batch, out_channels, spatial - 2, spatial - 2)
    print("KERNEL_OK")
</pallas_src>

<mosaic_0001>
module attributes {stable_mosaic.version = 11 : i64} {
  func.func @_conv_kernel(%arg0: i32, %arg1: memref<8x128xf32, #tpu.memory_space<vmem>>, %arg2: memref<128x256xf32, #tpu.memory_space<vmem>>, %arg3: memref<8x256xf32, #tpu.memory_space<vmem>>) attributes {dimension_semantics = [#tpu.dimension_semantics<parallel>], iteration_bounds = array<i64: 2>, scalar_prefetch = 0 : i64, scratch_operands = 0 : i64, tpu.core_type = #tpu.core_type<tc>, window_params = [{pipeline_mode = #tpu.pipeline_mode<synchronous>, transform_indices = @transform_0, window_bounds = array<i64: 8, 128>}, {transform_indices = @transform_1, window_bounds = array<i64: 128, 256>}, {transform_indices = @transform_2, window_bounds = array<i64: 8, 256>}]} {
    %c0 = arith.constant 0 : index
    %c0_0 = arith.constant 0 : index
    %0 = vector.load %arg1[%c0, %c0_0] : memref<8x128xf32, #tpu.memory_space<vmem>>, vector<8x128xf32>
    %c0_1 = arith.constant 0 : index
    %c0_2 = arith.constant 0 : index
    %1 = vector.load %arg2[%c0_1, %c0_2] : memref<128x256xf32, #tpu.memory_space<vmem>>, vector<128x256xf32>
    %cst = arith.constant dense<0.000000e+00> : vector<8x256xf32>
    %2 = tpu.matmul %0, %1, %cst {dimension_numbers = #tpu.dot_dimension_numbers<[1], [0], [0], [1], [0, 0, 1, 1], [], []>, precision = #tpu.contract_precision<fp32>} : vector<8x128xf32>, vector<128x256xf32>, vector<8x256xf32> -> vector<8x256xf32>
    %c0_3 = arith.constant 0 : index
    %c0_4 = arith.constant 0 : index
    %3 = vector.load %arg3[%c0_3, %c0_4] : memref<8x256xf32, #tpu.memory_space<vmem>>, vector<8x256xf32>
    tpu.vector_store %arg3[%c0_3, %c0_4], %2 {strides = array<i32>} : memref<8x256xf32, #tpu.memory_space<vmem>>, vector<8x256xf32>,
    return
  }
  func.func @transform_0(%arg0: i32) -> (i32, i32) {
    %c0_i32 = arith.constant 0 : i32
    %c0_i32_0 = arith.constant 0 : i32
    %c0_i32_1 = arith.constant 0 : i32
    return %c0_i32, %c0_i32_0 : i32, i32
  }
  func.func @transform_1(%arg0: i32) -> (i32, i32) {
    %c0_i32 = arith.constant 0 : i32
    %c0_i32_0 = arith.constant 0 : i32
    return %c0_i32, %arg0 : i32, i32
  }
  func.func @transform_2(%arg0: i32) -> (i32, i32) {
    %c0_i32 = arith.constant 0 : i32
    %c0_i32_0 = arith.constant 0 : i32
    return %c0_i32, %arg0 : i32, i32
  }
}

</mosaic_0001>

<llo_original>
// kernel: tpu_custom_call.1
$region0: #{tpu_custom_call.1}
  #allocation0 [shape = 'u32[]', space=smem, size = 0x4, offset = 0x4, fixed_abs, tag = 'smem constant byte address 0x4 - core index']
  #allocation1 [shape = 'u32[144,128]{1,0:T(1,128)}', space=vmem, size = 0x12000, scoped, tag = 'internal scratch']
  %s0 = inlined_call_operand.hbm [shape: f32[8,128], index: 0, kind: input, shape index: {}]
  %s1 = inlined_call_operand.hbm [shape: f32[128,512], index: 1, kind: input, shape index: {}]
  %s2 = inlined_call_operand.hbm [shape: f32[8,512], index: 2, kind: output, shape index: {}]
  %s3 = sld [smem:[#allocation0]]
  $region49: #{tpu_custom_call.1} parent=0
    _
  %s5 = ssub.s32 1, %s3
  %s6 = scalar_select 0, %s5, %s3
  $region1: #{tpu_custom_call.1} parent=0
    #allocation2 [shape = 'u8[4096]{0}', space=vmem, size = 0x1000, scoped, tag = 'input window, operand 0, single buffered']
    #allocation3 [shape = 's32[2]{0}', space=sflag, size = 0x8, scoped, tag = 'scoped memory for tpu_custom_call.1']
    #allocation4 [shape = 's32[2]{0}', space=sflag, size = 0x8, scoped, tag = 'scoped memory for tpu_custom_call.1']
    #allocation5 [shape = 'u8[262144]{0}', space=vmem, size = 0x40000, scoped, tag = 'input window, operand 1']
    #allocation6 [shape = 's32[2]{0}', space=sflag, size = 0x8, scoped, tag = 'scoped memory for tpu_custom_call.1']
    #allocation7 [shape = 'u8[16384]{0}', space=vmem, size = 0x4000, scoped, tag = 'output window, operand 0']
    %7 = vsyncpa [#allocation3], 0
    %8 = vsyncpa [#allocation6], 0
    %s9 = scalar_lea.sflag [#allocation6], 1
    %10 = vsyncpa %s9, 0
    %11 = vsyncpa [#allocation4], 0
    %s12 = scalar_lea.sflag [#allocation4], 1
    %13 = vsyncpa %s12, 0
    loop: start=0, step=1, limit=4
    $region2: #{tpu_custom_call.1} parent=1 // loop_pre_header
      _
    $region3: #{tpu_custom_call.1} parent=1 // loop_header
      %s15 = sphi 0, %s19
      %p16 = scmp.ge.s32.totalorder %s15, 4
      %s23 = sphi 0, %s23
      %s25 = sphi 0, %s23
      %s26 = sphi 0, %s25
      %s40 = sphi 0, %s26
      %s46 = sphi 0, %s48
      %s49 = sphi 0, %s46
      %s50 = sphi 0, %s49
      %s66 = sphi 0, %s50
      %s72 = sphi 0, %s74
      %s75 = sphi 0, %s72
      %s76 = sphi 0, %s75
      %s92 = sphi 0, %s76
    $region4: #{tpu_custom_call.1} parent=1 // loop_header_branch
      %18 = sbr.rel (%p16) target = $region8
    $region5: #{tpu_custom_call.1} parent=1 // loop_body
      %s20 = ssub.s32 %s15, 1
      %s21 = ssub.s32 %s15, 2
      %s22 = sadd.s32 %s15, 1
      %s24 = sadd.s32 %s23, 1
      %p27 = scmp.eq.s32.totalorder %s15, 1
      %p28 = scmp.ne.s32.totalorder %s23, %s25
      %p29 = scmp.eq.s32.totalorder %s15, 0
      %p30 = por %p28, %p29
      %p31 = scmp.ne.s32.totalorder %s23, %s25
      %p32 = scmp.eq.s32.totalorder %s20, 1
      %p33 = por %p31, %p32
      %p34 = scmp.ne.s32.totalorder %s25, %s26
      %p35 = scmp.eq.s32.totalorder %s20, 0
      %p36 = por %p34, %p35
      %p37 = scmp.ne.s32.totalorder %s25, %s26
      %p38 = scmp.eq.s32.totalorder %s21, 1
      %p39 = por %p37, %p38
      %p41 = scmp.ne.s32.totalorder %s26, %s40
      %p42 = scmp.eq.s32.totalorder %s21, 0
      %p43 = por %p41, %p42
      %s44 = ssub.s32 %s15, %s22
      %p45 = scmp.eq.s32.totalorder %s44, 0
      %s47 = sadd.s32 %s46, 1
      %s48 = scalar_select %p45, %s46, %s47
      %p51 = pneg %p45
      %p52 = scmp.eq.s32.totalorder %s15, 1
      %p53 = por %p51, %p52
      %p54 = scmp.ne.s32.totalorder %s46, %s49
      %p55 = scmp.eq.s32.totalorder %s15, 0
      %p56 = por %p54, %p55
      %p57 = scmp.ne.s32.totalorder %s46, %s49
      %p58 = scmp.eq.s32.totalorder %s20, 1
      %p59 = por %p57, %p58
      %p60 = scmp.ne.s32.totalorder %s49, %s50
      %p61 = scmp.eq.s32.totalorder %s20, 0
      %p62 = por %p60, %p61
      %p63 = scmp.ne.s32.totalorder %s49, %s50
      %p64 = scmp.eq.s32.totalorder %s21, 1
      %p65 = por %p63, %p64
      %p67 = scmp.ne.s32.totalorder %s50, %s66
      %p68 = scmp.eq.s32.totalorder %s21, 0
      %p69 = por %p67, %p68
      %s70 = ssub.s32 %s15, %s22
      %p71 = scmp.eq.s32.totalorder %s70, 0
      %s73 = sadd.s32 %s72, 1
      %s74 = scalar_select %p71, %s72, %s73
      %p77 = pneg %p71
      %p78 = scmp.eq.s32.totalorder %s15, 1
      %p79 = por %p77, %p78
      %p80 = scmp.ne.s32.totalorder %s72, %s75
      %p81 = scmp.eq.s32.totalorder %s15, 0
      %p82 = por %p80, %p81
      %p83 = scmp.ne.s32.totalorder %s72, %s75
      %p84 = scmp.eq.s32.totalorder %s20, 1
      %p85 = por %p83, %p84
      %p86 = scmp.ne.s32.totalorder %s75, %s76
      %p87 = scmp.eq.s32.totalorder %s20, 0
      %p88 = por %p86, %p87
      %p89 = scmp.ne.s32.totalorder %s75, %s76
      %p90 = scmp.eq.s32.totalorder %s21, 1
      %p91 = por %p89, %p90
      %p93 = scmp.ne.s32.totalorder %s76, %s92
      %p94 = scmp.eq.s32.totalorder %s21, 0
      %p95 = por %p93, %p94
      %p96 = scmp.le.s32.totalorder 1, %s15
      %p97 = scmp.lt.s32.totalorder %s15, 3
      %p98 = pnand %p96, %p97
      %p99 = pneg %p98
      // Predicated region
      $region9: #{tpu_custom_call.1} parent=5 // pred_check
        _
      $region10: #{tpu_custom_call.1} parent=5 // pred_check_branch
        %101 = sbr.rel (%p98) target = $region12
      $region11: #{tpu_custom_call.1} parent=5 // pred_region
        %s102 = ssub.s32 %s15, 1
        // Predicated region
        $region13: #{tpu_custom_call.1} parent=11 // pred_check
          %p103 = pneg %p36
        $region14: #{tpu_custom_call.1} parent=11 // pred_check_branch
          %105 = sbr.rel (%p103) target = $region16
        $region15: #{tpu_custom_call.1} parent=11 // pred_region
          %s107 = ssub.s32 128, 128
          %108 = vsyncadd [#allocation3], %s107
          %s110 = sshll.u32 [#allocation2], 4
          %s111 = int_to_ptr.vmem [resolvable:$true] %s110
          %113 = dma.hbm_to_vmem [thread:$0]  %s0, 128, %s111, [#allocation3]
        $region16: #{tpu_custom_call.1} parent=11 // pred_fallthru
          _
      $region12: #{tpu_custom_call.1} parent=5 // pred_fallthru
        _
      %p114 = scmp.lt.s32.totalorder %s15, 2
      // Predicated region
      $region17: #{tpu_custom_call.1} parent=5 // pred_check
        %p115 = pneg %p114
      $region18: #{tpu_custom_call.1} parent=5 // pred_check_branch
        %117 = sbr.rel (%p115) target = $region20
      $region19: #{tpu_custom_call.1} parent=5 // pred_region
        // Predicated region
        $region21: #{tpu_custom_call.1} parent=19 // pred_check
          %p118 = pneg %p56
        $region22: #{tpu_custom_call.1} parent=19 // pred_check_branch
          %120 = sbr.rel (%p118) target = $region24
        $region23: #{tpu_custom_call.1} parent=19 // pred_region
          %s121 = sand.u32 %s46, 1
          %s122 = scalar_lea.sflag [#allocation6], %s121
          %s123 = sand.u32 %s46, 1
          %s124 = smul.addr %s123, 256
          %s125 = scalar_lea.vmem [#allocation5], %s124
          %s126 = smul.u32 2, %s15
          %s128 = ssub.s32 4096, 4096
          %129 = vsyncadd %s122, %s128
          %s130 = smul.addr %s126, 128
          %s131 = scalar_lea.hbm %s1, %s130
          %s132 = sshll.u32 %s125, 4
          %s133 = int_to_ptr.vmem [resolvable:$true] %s132
          %138 = dma.hbm_to_vmem [thread:$0]  %s131, 4096, %s133, %s122, 512, 256, 16
        $region24: #{tpu_custom_call.1} parent=19 // pred_fallthru
          _
      $region20: #{tpu_custom_call.1} parent=5 // pred_fallthru
        _
      %p139 = scmp.le.s32.totalorder 1, %s15
      %p140 = scmp.lt.s32.totalorder %s15, 3
      %p141 = pnand %p139, %p140
      %p142 = pneg %p141
      // Predicated region
      $region25: #{tpu_custom_call.1} parent=5 // pred_check
        _
      $region26: #{tpu_custom_call.1} parent=5 // pred_check_branch
        %144 = sbr.rel (%p141) target = $region28
      $region27: #{tpu_custom_call.1} parent=5 // pred_region
        %s145 = ssub.s32 %s15, 1
        // Predicated region
        $region29: #{tpu_custom_call.1} parent=27 // pred_check
          %p146 = pneg %p36
        $region30: #{tpu_custom_call.1} parent=27 // pred_check_branch
          %148 = sbr.rel (%p146) target = $region32
        $region31: #{tpu_custom_call.1} parent=27 // pred_region
          %149 = dma.done [#allocation3], 128
        $region32: #{tpu_custom_call.1} parent=27 // pred_fallthru
          _
        %s150 = sand.u32 %s49, 1
        %s151 = scalar_lea.sflag [#allocation6], %s150
        %s152 = sand.u32 %s49, 1
        %s153 = smul.addr %s152, 256
        %s154 = scalar_lea.vmem [#allocation5], %s153
        // Predicated region
        $region33: #{tpu_custom_call.1} parent=27 // pred_check
          %p155 = pneg %p62
        $region34: #{tpu_custom_call.1} parent=27 // pred_check_branch
          %157 = sbr.rel (%p155) target = $region36
        $region35: #{tpu_custom_call.1} parent=27 // pred_region
          %158 = dma.done %s151, 4096
        $region36: #{tpu_custom_call.1} parent=27 // pred_fallthru
          _
        %p159 = pneg %p36
        %p160 = pneg %p33
        %s161 = sand.u32 %s49, 1
        %s162 = scalar_lea.sflag [#allocation6], %s161
        %s163 = sand.u32 %s49, 1
        %s164 = smul.addr %s163, 256
        %s165 = scalar_lea.vmem [#allocation5], %s164
        %p166 = pneg %p62
        %p167 = pneg %p59
        %p168 = pneg %p88
        %p169 = pneg %p85
        %s170 = sand.u32 %s75, 1
        %s171 = scalar_lea.sflag [#allocation4], %s170
        %s172 = sand.u32 %s75, 1
        %s173 = smul.addr %s172, 16
        %s174 = scalar_lea.vmem [#allocation7], %s173
        %s175 = smul.u32 2, %s20
        %s176 = smul.u32 2, %s20
        %v177 = vld [vmem:[#allocation2] sm:$0xff]
        %v178 = vld [vmem:[%s154] sm:$0xff]
        %v179 = vld [vmem:[%s154 + $0x8] sm:$0xff]
        %v180 = vld [vmem:[%s154 + $0x10] sm:$0xff]
        %v181 = vld [vmem:[%s154 + $0x18] sm:$0xff]
        %v182 = vld [vmem:[%s154 + $0x20] sm:$0xff]
        %v183 = vld [vmem:[%s154 + $0x28] sm:$0xff]
        %v184 = vld [vmem:[%s154 + $0x30] sm:$0xff]
        %v185 = vld [vmem:[%s154 + $0x38] sm:$0xff]
        %v186 = vld [vmem:[%s154 + $0x40] sm:$0xff]
        %v187 = vld [vmem:[%s154 + $0x48] sm:$0xff]
        %v188 = vld [vmem:[%s154 + $0x50] sm:$0xff]
        %v189 = vld [vmem:[%s154 + $0x58] sm:$0xff]
        %v190 = vld [vmem:[%s154 + $0x60] sm:$0xff]
        %v191 = vld [vmem:[%s154 + $0x68] sm:$0xff]
        %v192 = vld [vmem:[%s154 + $0x70] sm:$0xff]
        %v193 = vld [vmem:[%s154 + $0x78] sm:$0xff]
        %v194 = vld [vmem:[%s154 + $0x80] sm:$0xff]
        %v195 = vld [vmem:[%s154 + $0x88] sm:$0xff]
        %v196 = vld [vmem:[%s154 + $0x90] sm:$0xff]
        %v197 = vld [vmem:[%s154 + $0x98] sm:$0xff]
        %v198 = vld [vmem:[%s154 + $0xa0] sm:$0xff]
        %v199 = vld [vmem:[%s154 + $0xa8] sm:$0xff]
        %v200 = vld [vmem:[%s154 + $0xb0] sm:$0xff]
        %v201 = vld [vmem:[%s154 + $0xb8] sm:$0xff]
        %v202 = vld [vmem:[%s154 + $0xc0] sm:$0xff]
        %v203 = vld [vmem:[%s154 + $0xc8] sm:$0xff]
        %v204 = vld [vmem:[%s154 + $0xd0] sm:$0xff]
        %v205 = vld [vmem:[%s154 + $0xd8] sm:$0xff]
        %v206 = vld [vmem:[%s154 + $0xe0] sm:$0xff]
        %v207 = vld [vmem:[%s154 + $0xe8] sm:$0xff]
        %v208 = vld [vmem:[%s154 + $0xf0] sm:$0xff]
        %v209 = vld [vmem:[%s154 + $0xf8] sm:$0xff]
        %v210 = vand.u32 %v179, 4294901760
        %211 = vmatprep.subr.mxu0 %v210
        %v212 = vand.u32 %v178, 4294901760
        %213 = vmatpush1.msra.mxu0 %v212
        %v214 = vand.u32 %v181, 4294901760
        %215 = vmatprep.subr.mxu0 %v214
        %v216 = vand.u32 %v180, 4294901760
        %217 = vmatpush1.msra.mxu0 %v216
        %v218 = vand.u32 %v183, 4294901760
        %219 = vmatprep.subr.mxu0 %v218
        %v220 = vand.u32 %v182, 4294901760
        %221 = vmatpush1.msra.mxu0 %v220
        %v222 = vand.u32 %v185, 4294901760
        %223 = vmatprep.subr.mxu0 %v222
        %v224 = vand.u32 %v184, 4294901760
        %225 = vmatpush1.msra.mxu0 %v224
        %v226 = vand.u32 %v187, 4294901760
        %227 = vmatprep.subr.mxu0 %v226
        %v228 = vand.u32 %v186, 4294901760
        %229 = vmatpush1.msra.mxu0 %v228
        %v230 = vand.u32 %v189, 4294901760
        %231 = vmatprep.subr.mxu0 %v230
        %v232 = vand.u32 %v188, 4294901760
        %233 = vmatpush1.msra.mxu0 %v232
        %v234 = vand.u32 %v191, 4294901760
        %235 = vmatprep.subr.mxu0 %v234
        %v236 = vand.u32 %v190, 4294901760
        %237 = vmatpush1.msra.mxu0 %v236
        %v238 = vand.u32 %v193, 4294901760
        %239 = vmatprep.subr.mxu0 %v238
        %v240 = vand.u32 %v192, 4294901760
        %241 = vmatpush1.msra.mxu0 %v240
        %v242 = vand.u32 %v195, 4294901760
        %243 = vmatprep.subr.mxu0 %v242
        %v244 = vand.u32 %v194, 4294901760
        %245 = vmatpush1.msra.mxu0 %v244
        %v246 = vand.u32 %v197, 4294901760
        %247 = vmatprep.subr.mxu0 %v246
        %v248 = vand.u32 %v196, 4294901760
        %249 = vmatpush1.msra.mxu0 %v248
        %v250 = vand.u32 %v199, 4294901760
        %251 = vmatprep.subr.mxu0 %v250
        %v252 = vand.u32 %v198, 4294901760
        %253 = vmatpush1.msra.mxu0 %v252
        %v254 = vand.u32 %v201, 4294901760
        %255 = vmatprep.subr.mxu0 %v254
        %v256 = vand.u32 %v200, 4294901760
        %257 = vmatpush1.msra.mxu0 %v256
        %v258 = vand.u32 %v203, 4294901760
        %259 = vmatprep.subr.mxu0 %v258
        %v260 = vand.u32 %v202, 4294901760
        %261 = vmatpush1.msra.mxu0 %v260
        %v262 = vand.u32 %v205, 4294901760
        %263 = vmatprep.subr.mxu0 %v262
        %v264 = vand.u32 %v204, 4294901760
        %265 = vmatpush1.msra.mxu0 %v264
        %v266 = vand.u32 %v207, 4294901760
        %267 = vmatprep.subr.mxu0 %v266
        %v268 = vand.u32 %v206, 4294901760
        %269 = vmatpush1.msra.mxu0 %v268
        %v270 = vand.u32 %v209, 4294901760
        %271 = vmatprep.subr.mxu0 %v270
        %v272 = vand.u32 %v208, 4294901760
        %273 = vmatpush1.msra.mxu0 %v272
        %274 = vmatprep.subr.mxu0 0.0
        %275 = vmatpush1.msra.mxu0 0.0
        %276 = vmatprep.subr.mxu0 0.0
        %277 = vmatpush1.msra.mxu0 0.0
        %278 = vmatprep.subr.mxu0 0.0
        %279 = vmatpush1.msra.mxu0 0.0
        %280 = vmatprep.subr.mxu0 0.0
        %281 = vmatpush1.msra.mxu0 0.0
        %282 = vmatprep.subr.mxu0 0.0
        %283 = vmatpush1.msra.mxu0 0.0
        %284 = vmatprep.subr.mxu0 0.0
        %285 = vmatpush1.msra.mxu0 0.0
        %286 = vmatprep.subr.mxu0 0.0
        %287 = vmatpush1.msra.mxu0 0.0
        %288 = vmatprep.subr.mxu0 0.0
        %289 = vmatpush1.msra.mxu0 0.0
        %290 = vmatprep.subr.mxu0 0.0
        %291 = vmatpush1.msra.mxu0 0.0
        %292 = vmatprep.subr.mxu0 0.0
        %293 = vmatpush1.msra.mxu0 0.0
        %294 = vmatprep.subr.mxu0 0.0
        %295 = vmatpush1.msra.mxu0 0.0
        %296 = vmatprep.subr.mxu0 0.0
        %297 = vmatpush1.msra.mxu0 0.0
        %298 = vmatprep.subr.mxu0 0.0
        %299 = vmatpush1.msra.mxu0 0.0
        %300 = vmatprep.subr.mxu0 0.0
        %301 = vmatpush1.msra.mxu0 0.0
        %302 = vmatprep.subr.mxu0 0.0
        %303 = vmatpush1.msra.mxu0 0.0
        %304 = vmatprep.subr.mxu0 0.0
        %305 = vmatpush1.msra.mxu0 0.0
        %306 = vmatprep.mubr.f32.mxu0 0.0
        %v307 = vand.u32 %v177, 4294901760
        %v308 = vsub.f32 %v177, %v307
        %v309 = vand.u32 %v308, 4294901760
        %v310 = vsub.f32 %v308, %v309
        %v311 = vand.u32 %v310, 4294901760
        %312 = vmatmul.mubr.f32.gmra.mrb[0].mxu0 %v311
        %v313 = vpop.f32.mrb[0].mxu0
        %v314 = vadd.f32 0.0, %v313
        %v315 = vpop.f32.mrb[0].mxu0
        %v316 = vadd.f32 0.0, %v315
        %317 = vdwg.mxu0
        %v318 = vand.u32 %v179, 4294901760
        %v319 = vsub.f32 %v179, %v318
        %v320 = vand.u32 %v319, 4294901760
        %v321 = vsub.f32 %v319, %v320
        %v322 = vand.u32 %v321, 4294901760
        %323 = vmatprep.subr.mxu0 %v322
        %v324 = vand.u32 %v178, 4294901760
        %v325 = vsub.f32 %v178, %v324
        %v326 = vand.u32 %v325, 4294901760
        %v327 = vsub.f32 %v325, %v326
        %v328 = vand.u32 %v327, 4294901760
        %329 = vmatpush1.msra.mxu0 %v328
        %v330 = vand.u32 %v181, 4294901760
        %v331 = vsub.f32 %v181, %v330
        %v332 = vand.u32 %v331, 4294901760
        %v333 = vsub.f32 %v331, %v332
        %v334 = vand.u32 %v333, 4294901760
        %335 = vmatprep.subr.mxu0 %v334
        %v336 = vand.u32 %v180, 4294901760
        %v337 = vsub.f32 %v180, %v336
        %v338 = vand.u32 %v337, 4294901760
        %v339 = vsub.f32 %v337, %v338
        %v340 = vand.u32 %v339, 4294901760
        %341 = vmatpush1.msra.mxu0 %v340
        %v342 = vand.u32 %v183, 4294901760
        %v343 = vsub.f32 %v183, %v342
        %v344 = vand.u32 %v343, 4294901760
        %v345 = vsub.f32 %v343, %v344
        %v346 = vand.u32 %v345, 4294901760
        %347 = vmatprep.subr.mxu0 %v346
        %v348 = vand.u32 %v182, 4294901760
        %v349 = vsub.f32 %v182, %v348
        %v350 = vand.u32 %v349, 4294901760
        %v351 = vsub.f32 %v349, %v350
        %v352 = vand.u32 %v351, 4294901760
        %353 = vmatpush1.msra.mxu0 %v352
        %v354 = vand.u32 %v185, 4294901760
        %v355 = vsub.f32 %v185, %v354
        %v356 = vand.u32 %v355, 4294901760
        %v357 = vsub.f32 %v355, %v356
        %v358 = vand.u32 %v357, 4294901760
        %359 = vmatprep.subr.mxu0 %v358
        %v360 = vand.u32 %v184, 4294901760
        %v361 = vsub.f32 %v184, %v360
        %v362 = vand.u32 %v361, 4294901760
        %v363 = vsub.f32 %v361, %v362
        %v364 = vand.u32 %v363, 4294901760
        %365 = vmatpush1.msra.mxu0 %v364
        %v366 = vand.u32 %v187, 4294901760
        %v367 = vsub.f32 %v187, %v366
        %v368 = vand.u32 %v367, 4294901760
        %v369 = vsub.f32 %v367, %v368
        %v370 = vand.u32 %v369, 4294901760
        %371 = vmatprep.subr.mxu0 %v370
        %v372 = vand.u32 %v186, 4294901760
        %v373 = vsub.f32 %v186, %v372
        %v374 = vand.u32 %v373, 4294901760
        %v375 = vsub.f32 %v373, %v374
        %v376 = vand.u32 %v375, 4294901760
        %377 = vmatpush1.msra.mxu0 %v376
        %v378 = vand.u32 %v189, 4294901760
        %v379 = vsub.f32 %v189, %v378
        %v380 = vand.u32 %v379, 4294901760
        %v381 = vsub.f32 %v379, %v380
        %v382 = vand.u32 %v381, 4294901760
        %383 = vmatprep.subr.mxu0 %v382
        %v384 = vand.u32 %v188, 4294901760
        %v385 = vsub.f32 %v188, %v384
        %v386 = vand.u32 %v385, 4294901760
        %v387 = vsub.f32 %v385, %v386
        %v388 = vand.u32 %v387, 4294901760
        %389 = vmatpush1.msra.mxu0 %v388
        %v390 = vand.u32 %v191, 4294901760
        %v391 = vsub.f32 %v191, %v390
        %v392 = vand.u32 %v391, 4294901760
        %v393 = vsub.f32 %v391, %v392
        %v394 = vand.u32 %v393, 4294901760
        %395 = vmatprep.subr.mxu0 %v394
        %v396 = vand.u32 %v190, 4294901760
        %v397 = vsub.f32 %v190, %v396
        %v398 = vand.u32 %v397, 4294901760
        %v399 = vsub.f32 %v397, %v398
        %v400 = vand.u32 %v399, 4294901760
        %401 = vmatpush1.msra.mxu0 %v400
        %v402 = vand.u32 %v193, 4294901760
        %v403 = vsub.f32 %v193, %v402
        %v404 = vand.u32 %v403, 4294901760
        %v405 = vsub.f32 %v403, %v404
        %v406 = vand.u32 %v405, 4294901760
        %407 = vmatprep.subr.mxu0 %v406
        %v408 = vand.u32 %v192, 4294901760
        %v409 = vsub.f32 %v192, %v408
        %v410 = vand.u32 %v409, 4294901760
        %v411 = vsub.f32 %v409, %v410
        %v412 = vand.u32 %v411, 4294901760
        %413 = vmatpush1.msra.mxu0 %v412
        %v414 = vand.u32 %v195, 4294901760
        %v415 = vsub.f32 %v195, %v414
        %v416 = vand.u32 %v415, 4294901760
        %v417 = vsub.f32 %v415, %v416
        %v418 = vand.u32 %v417, 4294901760
        %419 = vmatprep.subr.mxu0 %v418
        %v420 = vand.u32 %v194, 4294901760
        %v421 = vsub.f32 %v194, %v420
        %v422 = vand.u32 %v421, 4294901760
        %v423 = vsub.f32 %v421, %v422
        %v424 = vand.u32 %v423, 4294901760
        %425 = vmatpush1.msra.mxu0 %v424
        %v426 = vand.u32 %v197, 4294901760
        %v427 = vsub.f32 %v197, %v426
        %v428 = vand.u32 %v427, 4294901760
        %v429 = vsub.f32 %v427, %v428
        %v430 = vand.u32 %v429, 4294901760
        %431 = vmatprep.subr.mxu0 %v430
        %v432 = vand.u32 %v196, 4294901760
        %v433 = vsub.f32 %v196, %v432
        %v434 = vand.u32 %v433, 4294901760
        %v435 = vsub.f32 %v433, %v434
        %v436 = vand.u32 %v435, 4294901760
        %437 = vmatpush1.msra.mxu0 %v436
        %v438 = vand.u32 %v199, 4294901760
        %v439 = vsub.f32 %v199, %v438
        %v440 = vand.u32 %v439, 4294901760
        %v441 = vsub.f32 %v439, %v440
        %v442 = vand.u32 %v441, 4294901760
        %443 = vmatprep.subr.mxu0 %v442
        %v444 = vand.u32 %v198, 4294901760
        %v445 = vsub.f32 %v198, %v444
        %v446 = vand.u32 %v445, 4294901760
        %v447 = vsub.f32 %v445, %v446
        %v448 = vand.u32 %v447, 4294901760
        %449 = vmatpush1.msra.mxu0 %v448
        %v450 = vand.u32 %v201, 4294901760
        %v451 = vsub.f32 %v201, %v450
        %v452 = vand.u32 %v451, 4294901760
        %v453 = vsub.f32 %v451, %v452
        %v454 = vand.u32 %v453, 4294901760
        %455 = vmatprep.subr.mxu0 %v454
        %v456 = vand.u32 %v200, 4294901760
        %v457 = vsub.f32 %v200, %v456
        %v458 = vand.u32 %v457, 4294901760
        %v459 = vsub.f32 %v457, %v458
        %v460 = vand.u32 %v459, 4294901760
        %461 = vmatpush1.msra.mxu0 %v460
        %v462 = vand.u32 %v203, 4294901760
        %v463 = vsub.f32 %v203, %v462
        %v464 = vand.u32 %v463, 4294901760
        %v465 = vsub.f32 %v463, %v464
        %v466 = vand.u32 %v465, 4294901760
        %467 = vmatprep.subr.mxu0 %v466
        %v468 = vand.u32 %v202, 4294901760
        %v469 = vsub.f32 %v202, %v468
        %v470 = vand.u32 %v469, 4294901760
        %v471 = vsub.f32 %v469, %v470
        %v472 = vand.u32 %v471, 4294901760
        %473 = vmatpush1.msra.mxu0 %v472
        %v474 = vand.u32 %v205, 4294901760
        %v475 = vsub.f32 %v205, %v474
        %v476 = vand.u32 %v475, 4294901760
        %v477 = vsub.f32 %v475, %v476
        %v478 = vand.u32 %v477, 4294901760
        %479 = vmatprep.subr.mxu0 %v478
        %v480 = vand.u32 %v204, 4294901760
        %v481 = vsub.f32 %v204, %v480
        %v482 = vand.u32 %v481, 4294901760
        %v483 = vsub.f32 %v481, %v482
        %v484 = vand.u32 %v483, 4294901760
        %485 = vmatpush1.msra.mxu0 %v484
        %v486 = vand.u32 %v207, 4294901760
        %v487 = vsub.f32 %v207, %v486
        %v488 = vand.u32 %v487, 4294901760
        %v489 = vsub.f32 %v487, %v488
        %v490 = vand.u32 %v489, 4294901760
        %491 = vmatprep.subr.mxu0 %v490
        %v492 = vand.u32 %v206, 4294901760
        %v493 = vsub.f32 %v206, %v492
        %v494 = vand.u32 %v493, 4294901760
        %v495 = vsub.f32 %v493, %v494
        %v496 = vand.u32 %v495, 4294901760
        %497 = vmatpush1.msra.mxu0 %v496
        %v498 = vand.u32 %v209, 4294901760
        %v499 = vsub.f32 %v209, %v498
        %v500 = vand.u32 %v499, 4294901760
        %v501 = vsub.f32 %v499, %v500
        %v502 = vand.u32 %v501, 4294901760
        %503 = vmatprep.subr.mxu0 %v502
        %v504 = vand.u32 %v208, 4294901760
        %v505 = vsub.f32 %v208, %v504
        %v506 = vand.u32 %v505, 4294901760
        %v507 = vsub.f32 %v505, %v506
        %v508 = vand.u32 %v507, 4294901760
        %509 = vmatpush1.msra.mxu0 %v508
        %510 = vmatprep.subr.mxu0 0.0
        %511 = vmatpush1.msra.mxu0 0.0
        %512 = vmatprep.subr.mxu0 0.0
        %513 = vmatpush1.msra.mxu0 0.0
        %514 = vmatprep.subr.mxu0 0.0
        %515 = vmatpush1.msra.mxu0 0.0
        %516 = vmatprep.subr.mxu0 0.0
        %517 = vmatpush1.msra.mxu0 0.0
        %518 = vmatprep.subr.mxu0 0.0
        %519 = vmatpush1.msra.mxu0 0.0
        %520 = vmatprep.subr.mxu0 0.0
        %521 = vmatpush1.msra.mxu0 0.0
        %522 = vmatprep.subr.mxu0 0.0
        %523 = vmatpush1.msra.mxu0 0.0
        %524 = vmatprep.subr.mxu0 0.0
        %525 = vmatpush1.msra.mxu0 0.0
        %526 = vmatprep.subr.mxu0 0.0
        %527 = vmatpush1.msra.mxu0 0.0
        %528 = vmatprep.subr.mxu0 0.0
        %529 = vmatpush1.msra.mxu0 0.0
        %530 = vmatprep.subr.mxu0 0.0
        %531 = vmatpush1.msra.mxu0 0.0
        %532 = vmatprep.subr.mxu0 0.0
        %533 = vmatpush1.msra.mxu0 0.0
        %534 = vmatprep.subr.mxu0 0.0
        %535 = vmatpush1.msra.mxu0 0.0
        %536 = vmatprep.subr.mxu0 0.0
        %537 = vmatpush1.msra.mxu0 0.0
        %538 = vmatprep.subr.mxu0 0.0
        %539 = vmatpush1.msra.mxu0 0.0
        %540 = vmatprep.subr.mxu0 0.0
        %541 = vmatpush1.msra.mxu0 0.0
        %542 = vmatprep.mubr.f32.mxu0 0.0
        %v543 = vand.u32 %v177, 4294901760
        %544 = vmatmul.mubr.f32.gmra.mrb[0].mxu0 %v543
        %v545 = vpop.f32.mrb[0].mxu0
        %v546 = vadd.f32 %v314, %v545
        %v547 = vpop.f32.mrb[0].mxu0
        %v548 = vadd.f32 %v316, %v547
        %549 = vdwg.mxu0
        %v550 = vand.u32 %v179, 4294901760
        %v551 = vsub.f32 %v179, %v550
        %552 = vmatprep.subr.mxu0 %v551
        %v553 = vand.u32 %v178, 4294901760
        %v554 = vsub.f32 %v178, %v553
        %555 = vmatpush1.msra.mxu0 %v554
        %v556 = vand.u32 %v181, 4294901760
        %v557 = vsub.f32 %v181, %v556
        %558 = vmatprep.subr.mxu0 %v557
        %v559 = vand.u32 %v180, 4294901760
        %v560 = vsub.f32 %v180, %v559
        %561 = vmatpush1.msra.mxu0 %v560
        %v562 = vand.u32 %v183, 4294901760
        %v563 = vsub.f32 %v183, %v562
        %564 = vmatprep.subr.mxu0 %v563
        %v565 = vand.u32 %v182, 4294901760
        %v566 = vsub.f32 %v182, %v565
        %567 = vmatpush1.msra.mxu0 %v566
        %v568 = vand.u32 %v185, 4294901760
        %v569 = vsub.f32 %v185, %v568
        %570 = vmatprep.subr.mxu0 %v569
        %v571 = vand.u32 %v184, 4294901760
        %v572 = vsub.f32 %v184, %v571
        %573 = vmatpush1.msra.mxu0 %v572
        %v574 = vand.u32 %v187, 4294901760
        %v575 = vsub.f32 %v187, %v574
        %576 = vmatprep.subr.mxu0 %v575
        %v577 = vand.u32 %v186, 4294901760
        %v578 = vsub.f32 %v186, %v577
        %579 = vmatpush1.msra.mxu0 %v578
        %v580 = vand.u32 %v189, 4294901760
        %v581 = vsub.f32 %v189, %v580
        %582 = vmatprep.subr.mxu0 %v581
        %v583 = vand.u32 %v188, 4294901760
        %v584 = vsub.f32 %v188, %v583
        %585 = vmatpush1.msra.mxu0 %v584
        %v586 = vand.u32 %v191, 4294901760
        %v587 = vsub.f32 %v191, %v586
        %588 = vmatprep.subr.mxu0 %v587
        %v589 = vand.u32 %v190, 4294901760
        %v590 = vsub.f32 %v190, %v589
        %591 = vmatpush1.msra.mxu0 %v590
        %v592 = vand.u32 %v193, 4294901760
        %v593 = vsub.f32 %v193, %v592
        %594 = vmatprep.subr.mxu0 %v593
        %v595 = vand.u32 %v192, 4294901760
        %v596 = vsub.f32 %v192, %v595
        %597 = vmatpush1.msra.mxu0 %v596
        %v598 = vand.u32 %v195, 4294901760
        %v599 = vsub.f32 %v195, %v598
        %600 = vmatprep.subr.mxu0 %v599
        %v601 = vand.u32 %v194, 4294901760
        %v602 = vsub.f32 %v194, %v601
        %603 = vmatpush1.msra.mxu0 %v602
        %v604 = vand.u32 %v197, 4294901760
        %v605 = vsub.f32 %v197, %v604
        %606 = vmatprep.subr.mxu0 %v605
        %v607 = vand.u32 %v196, 4294901760
        %v608 = vsub.f32 %v196, %v607
        %609 = vmatpush1.msra.mxu0 %v608
        %v610 = vand.u32 %v199, 4294901760
        %v611 = vsub.f32 %v199, %v610
        %612 = vmatprep.subr.mxu0 %v611
        %v613 = vand.u32 %v198, 4294901760
        %v614 = vsub.f32 %v198, %v613
        %615 = vmatpush1.msra.mxu0 %v614
        %v616 = vand.u32 %v201, 4294901760
        %v617 = vsub.f32 %v201, %v616
        %618 = vmatprep.subr.mxu0 %v617
        %v619 = vand.u32 %v200, 4294901760
        %v620 = vsub.f32 %v200, %v619
        %621 = vmatpush1.msra.mxu0 %v620
        %v622 = vand.u32 %v203, 4294901760
        %v623 = vsub.f32 %v203, %v622
        %624 = vmatprep.subr.mxu0 %v623
        %v625 = vand.u32 %v202, 4294901760
        %v626 = vsub.f32 %v202, %v625
        %627 = vmatpush1.msra.mxu0 %v626
        %v628 = vand.u32 %v205, 4294901760
        %v629 = vsub.f32 %v205, %v628
        %630 = vmatprep.subr.mxu0 %v629
        %v631 = vand.u32 %v204, 4294901760
        %v632 = vsub.f32 %v204, %v631
        %633 = vmatpush1.msra.mxu0 %v632
        %v634 = vand.u32 %v207, 4294901760
        %v635 = vsub.f32 %v207, %v634
        %636 = vmatprep.subr.mxu0 %v635
        %v637 = vand.u32 %v206, 4294901760
        %v638 = vsub.f32 %v206, %v637
        %639 = vmatpush1.msra.mxu0 %v638
        %v640 = vand.u32 %v209, 4294901760
        %v641 = vsub.f32 %v209, %v640
        %642 = vmatprep.subr.mxu0 %v641
        %v643 = vand.u32 %v208, 4294901760
        %v644 = vsub.f32 %v208, %v643
        %645 = vmatpush1.msra.mxu0 %v644
        %646 = vmatprep.subr.mxu0 0.0
        %647 = vmatpush1.msra.mxu0 0.0
        %648 = vmatprep.subr.mxu0 0.0
        %649 = vmatpush1.msra.mxu0 0.0
        %650 = vmatprep.subr.mxu0 0.0
        %651 = vmatpush1.msra.mxu0 0.0
        %652 = vmatprep.subr.mxu0 0.0
        %653 = vmatpush1.msra.mxu0 0.0
        %654 = vmatprep.subr.mxu0 0.0
        %655 = vmatpush1.msra.mxu0 0.0
        %656 = vmatprep.subr.mxu0 0.0
        %657 = vmatpush1.msra.mxu0 0.0
        %658 = vmatprep.subr.mxu0 0.0
        %659 = vmatpush1.msra.mxu0 0.0
        %660 = vmatprep.subr.mxu0 0.0
        %661 = vmatpush1.msra.mxu0 0.0
        %662 = vmatprep.subr.mxu0 0.0
        %663 = vmatpush1.msra.mxu0 0.0
        %664 = vmatprep.subr.mxu0 0.0
        %665 = vmatpush1.msra.mxu0 0.0
        %666 = vmatprep.subr.mxu0 0.0
        %667 = vmatpush1.msra.mxu0 0.0
        %668 = vmatprep.subr.mxu0 0.0
        %669 = vmatpush1.msra.mxu0 0.0
        %670 = vmatprep.subr.mxu0 0.0
        %671 = vmatpush1.msra.mxu0 0.0
        %672 = vmatprep.subr.mxu0 0.0
        %673 = vmatpush1.msra.mxu0 0.0
        %674 = vmatprep.subr.mxu0 0.0
        %675 = vmatpush1.msra.mxu0 0.0
        %676 = vmatprep.subr.mxu0 0.0
        %677 = vmatpush1.msra.mxu0 0.0
        %678 = vmatprep.mubr.f32.mxu0 0.0
        %v679 = vand.u32 %v177, 4294901760
        %v680 = vsub.f32 %v177, %v679
        %681 = vmatmul.mubr.f32.gmra.mrb[0].mxu0 %v680
        %v682 = vpop.f32.mrb[0].mxu0
        %v683 = vadd.f32 %v546, %v682
        %v684 = vpop.f32.mrb[0].mxu0
        %v685 = vadd.f32 %v548, %v684
        %686 = vdwg.mxu0
        %v687 = vand.u32 %v179, 4294901760
        %688 = vmatprep.subr.mxu0 %v687
        %v689 = vand.u32 %v178, 4294901760
        %690 = vmatpush1.msra.mxu0 %v689
        %v691 = vand.u32 %v181, 4294901760
        %692 = vmatprep.subr.mxu0 %v691
        %v693 = vand.u32 %v180, 4294901760
        %694 = vmatpush1.msra.mxu0 %v693
        %v695 = vand.u32 %v183, 4294901760
        %696 = vmatprep.subr.mxu0 %v695
        %v697 = vand.u32 %v182, 4294901760
        %698 = vmatpush1.msra.mxu0 %v697
        %v699 = vand.u32 %v185, 4294901760
        %700 = vmatprep.subr.mxu0 %v699
        %v701 = vand.u32 %v184, 4294901760
        %702 = vmatpush1.msra.mxu0 %v701
        %v703 = vand.u32 %v187, 4294901760
        %704 = vmatprep.subr.mxu0 %v703
        %v705 = vand.u32 %v186, 4294901760
        %706 = vmatpush1.msra.mxu0 %v705
        %v707 = vand.u32 %v189, 4294901760
        %708 = vmatprep.subr.mxu0 %v707
        %v709 = vand.u32 %v188, 4294901760
        %710 = vmatpush1.msra.mxu0 %v709
        %v711 = vand.u32 %v191, 4294901760
        %712 = vmatprep.subr.mxu0 %v711
        %v713 = vand.u32 %v190, 4294901760
        %714 = vmatpush1.msra.mxu0 %v713
        %v715 = vand.u32 %v193, 4294901760
        %716 = vmatprep.subr.mxu0 %v715
        %v717 = vand.u32 %v192, 4294901760
        %718 = vmatpush1.msra.mxu0 %v717
        %v719 = vand.u32 %v195, 4294901760
        %720 = vmatprep.subr.mxu0 %v719
        %v721 = vand.u32 %v194, 4294901760
        %722 = vmatpush1.msra.mxu0 %v721
        %v723 = vand.u32 %v197, 4294901760
        %724 = vmatprep.subr.mxu0 %v723
        %v725 = vand.u32 %v196, 4294901760
        %726 = vmatpush1.msra.mxu0 %v725
        %v727 = vand.u32 %v199, 4294901760
        %728 = vmatprep.subr.mxu0 %v727
        %v729 = vand.u32 %v198, 4294901760
        %730 = vmatpush1.msra.mxu0 %v729
        %v731 = vand.u32 %v201, 4294901760
        %732 = vmatprep.subr.mxu0 %v731
        %v733 = vand.u32 %v200, 4294901760
        %734 = vmatpush1.msra.mxu0 %v733
        %v735 = vand.u32 %v203, 4294901760
        %736 = vmatprep.subr.mxu0 %v735
        %v737 = vand.u32 %v202, 4294901760
        %738 = vmatpush1.msra.mxu0 %v737
        %v739 = vand.u32 %v205, 4294901760
        %740 = vmatprep.subr.mxu0 %v739
        %v741 = vand.u32 %v204, 4294901760
        %742 = vmatpush1.msra.mxu0 %v741
        %v743 = vand.u32 %v207, 4294901760
        %744 = vmatprep.subr.mxu0 %v743
        %v745 = vand.u32 %v206, 4294901760
        %746 = vmatpush1.msra.mxu0 %v745
        %v747 = vand.u32 %v209, 4294901760
        %748 = vmatprep.subr.mxu0 %v747
        %v749 = vand.u32 %v208, 4294901760
        %750 = vmatpush1.msra.mxu0 %v749
        %751 = vmatprep.subr.mxu0 0.0
        %752 = vmatpush1.msra.mxu0 0.0
        %753 = vmatprep.subr.mxu0 0.0
        %754 = vmatpush1.msra.mxu0 0.0
        %755 = vmatprep.subr.mxu0 0.0
        %756 = vmatpush1.msra.mxu0 0.0
        %757 = vmatprep.subr.mxu0 0.0
        %758 = vmatpush1.msra.mxu0 0.0
        %759 = vmatprep.subr.mxu0 0.0
        %760 = vmatpush1.msra.mxu0 0.0
        %761 = vmatprep.subr.mxu0 0.0
        %762 = vmatpush1.msra.mxu0 0.0
        %763 = vmatprep.subr.mxu0 0.0
        %764 = vmatpush1.msra.mxu0 0.0
        %765 = vmatprep.subr.mxu0 0.0
        %766 = vmatpush1.msra.mxu0 0.0
        %767 = vmatprep.subr.mxu0 0.0
        %768 = vmatpush1.msra.mxu0 0.0
        %769 = vmatprep.subr.mxu0 0.0
        %770 = vmatpush1.msra.mxu0 0.0
        %771 = vmatprep.subr.mxu0 0.0
        %772 = vmatpush1.msra.mxu0 0.0
        %773 = vmatprep.subr.mxu0 0.0
        %774 = vmatpush1.msra.mxu0 0.0
        %775 = vmatprep.subr.mxu0 0.0
        %776 = vmatpush1.msra.mxu0 0.0
        %777 = vmatprep.subr.mxu0 0.0
        %778 = vmatpush1.msra.mxu0 0.0
        %779 = vmatprep.subr.mxu0 0.0
        %780 = vmatpush1.msra.mxu0 0.0
        %781 = vmatprep.subr.mxu0 0.0
        %782 = vmatpush1.msra.mxu0 0.0
        %783 = vmatprep.mubr.f32.mxu0 0.0
        %v784 = vand.u32 %v177, 4294901760
        %v785 = vsub.f32 %v177, %v784
        %v786 = vand.u32 %v785, 4294901760
        %787 = vmatmul.mubr.f32.gmra.mrb[0].mxu0 %v786
        %v788 = vpop.f32.mrb[0].mxu0
        %v789 = vadd.f32 %v683, %v788
        %v790 = vpop.f32.mrb[0].mxu0
        %v791 = vadd.f32 %v685, %v790
        %792 = vdwg.mxu0
        %v793 = vand.u32 %v179, 4294901760
        %v794 = vsub.f32 %v179, %v793
        %v795 = vand.u32 %v794, 4294901760
        %796 = vmatprep.subr.mxu0 %v795
        %v797 = vand.u32 %v178, 4294901760
        %v798 = vsub.f32 %v178, %v797
        %v799 = vand.u32 %v798, 4294901760
        %800 = vmatpush1.msra.mxu0 %v799
        %v801 = vand.u32 %v181, 4294901760
        %v802 = vsub.f32 %v181, %v801
        %v803 = vand.u32 %v802, 4294901760
        %804 = vmatprep.subr.mxu0 %v803
        %v805 = vand.u32 %v180, 4294901760
        %v806 = vsub.f32 %v180, %v805
        %v807 = vand.u32 %v806, 4294901760
        %808 = vmatpush1.msra.mxu0 %v807
        %v809 = vand.u32 %v183, 4294901760
        %v810 = vsub.f32 %v183, %v809
        %v811 = vand.u32 %v810, 4294901760
        %812 = vmatprep.subr.mxu0 %v811
        %v813 = vand.u32 %v182, 4294901760
        %v814 = vsub.f32 %v182, %v813
        %v815 = vand.u32 %v814, 4294901760
        %816 = vmatpush1.msra.mxu0 %v815
        %v817 = vand.u32 %v185, 4294901760
        %v818 = vsub.f32 %v185, %v817
        %v819 = vand.u32 %v818, 4294901760
        %820 = vmatprep.subr.mxu0 %v819
        %v821 = vand.u32 %v184, 4294901760
        %v822 = vsub.f32 %v184, %v821
        %v823 = vand.u32 %v822, 4294901760
        %824 = vmatpush1.msra.mxu0 %v823
        %v825 = vand.u32 %v187, 4294901760
        %v826 = vsub.f32 %v187, %v825
        %v827 = vand.u32 %v826, 4294901760
        %828 = vmatprep.subr.mxu0 %v827
        %v829 = vand.u32 %v186, 4294901760
        %v830 = vsub.f32 %v186, %v829
        %v831 = vand.u32 %v830, 4294901760
        %832 = vmatpush1.msra.mxu0 %v831
        %v833 = vand.u32 %v189, 4294901760
        %v834 = vsub.f32 %v189, %v833
        %v835 = vand.u32 %v834, 4294901760
        %836 = vmatprep.subr.mxu0 %v835
        %v837 = vand.u32 %v188, 4294901760
        %v838 = vsub.f32 %v188, %v837
        %v839 = vand.u32 %v838, 4294901760
        %840 = vmatpush1.msra.mxu0 %v839
        %v841 = vand.u32 %v191, 4294901760
        %v842 = vsub.f32 %v191, %v841
        %v843 = vand.u32 %v842, 4294901760
        %844 = vmatprep.subr.mxu0 %v843
        %v845 = vand.u32 %v190, 4294901760
        %v846 = vsub.f32 %v190, %v845
        %v847 = vand.u32 %v846, 4294901760
        %848 = vmatpush1.msra.mxu0 %v847
        %v849 = vand.u32 %v193, 4294901760
        %v850 = vsub.f32 %v193, %v849
        %v851 = vand.u32 %v850, 4294901760
        %852 = vmatprep.subr.mxu0 %v851
        %v853 = vand.u32 %v192, 4294901760
        %v854 = vsub.f32 %v192, %v853
        %v855 = vand.u32 %v854, 4294901760
        %856 = vmatpush1.msra.mxu0 %v855
        %v857 = vand.u32 %v195, 4294901760
        %v858 = vsub.f32 %v195, %v857
        %v859 = vand.u32 %v858, 4294901760
        %860 = vmatprep.subr.mxu0 %v859
        %v861 = vand.u32 %v194, 4294901760
        %v862 = vsub.f32 %v194, %v861
        %v863 = vand.u32 %v862, 4294901760
        %864 = vmatpush1.msra.mxu0 %v863
        %v865 = vand.u32 %v197, 4294901760
        %v866 = vsub.f32 %v197, %v865
        %v867 = vand.u32 %v866, 4294901760
        %868 = vmatprep.subr.mxu0 %v867
        %v869 = vand.u32 %v196, 4294901760
        %v870 = vsub.f32 %v196, %v869
        %v871 = vand.u32 %v870, 4294901760
        %872 = vmatpush1.msra.mxu0 %v871
        %v873 = vand.u32 %v199, 4294901760
        %v874 = vsub.f32 %v199, %v873
        %v875 = vand.u32 %v874, 4294901760
        %876 = vmatprep.subr.mxu0 %v875
        %v877 = vand.u32 %v198, 4294901760
        %v878 = vsub.f32 %v198, %v877
        %v879 = vand.u32 %v878, 4294901760
        %880 = vmatpush1.msra.mxu0 %v879
        %v881 = vand.u32 %v201, 4294901760
        %v882 = vsub.f32 %v201, %v881
        %v883 = vand.u32 %v882, 4294901760
        %884 = vmatprep.subr.mxu0 %v883
        %v885 = vand.u32 %v200, 4294901760
        %v886 = vsub.f32 %v200, %v885
        %v887 = vand.u32 %v886, 4294901760
        %888 = vmatpush1.msra.mxu0 %v887
        %v889 = vand.u32 %v203, 4294901760
        %v890 = vsub.f32 %v203, %v889
        %v891 = vand.u32 %v890, 4294901760
        %892 = vmatprep.subr.mxu0 %v891
        %v893 = vand.u32 %v202, 4294901760
        %v894 = vsub.f32 %v202, %v893
        %v895 = vand.u32 %v894, 4294901760
        %896 = vmatpush1.msra.mxu0 %v895
        %v897 = vand.u32 %v205, 4294901760
        %v898 = vsub.f32 %v205, %v897
        %v899 = vand.u32 %v898, 4294901760
        %900 = vmatprep.subr.mxu0 %v899
        %v901 = vand.u32 %v204, 4294901760
        %v902 = vsub.f32 %v204, %v901
        %v903 = vand.u32 %v902, 4294901760
        %904 = vmatpush1.msra.mxu0 %v903
        %v905 = vand.u32 %v207, 4294901760
        %v906 = vsub.f32 %v207, %v905
        %v907 = vand.u32 %v906, 4294901760
        %908 = vmatprep.subr.mxu0 %v907
        %v909 = vand.u32 %v206, 4294901760
        %v910 = vsub.f32 %v206, %v909
        %v911 = vand.u32 %v910, 4294901760
        %912 = vmatpush1.msra.mxu0 %v911
        %v913 = vand.u32 %v209, 4294901760
        %v914 = vsub.f32 %v209, %v913
        %v915 = vand.u32 %v914, 4294901760
        %916 = vmatprep.subr.mxu0 %v915
        %v917 = vand.u32 %v208, 4294901760
        %v918 = vsub.f32 %v208, %v917
        %v919 = vand.u32 %v918, 4294901760
        %920 = vmatpush1.msra.mxu0 %v919
        %921 = vmatprep.subr.mxu0 0.0
        %922 = vmatpush1.msra.mxu0 0.0
        %923 = vmatprep.subr.mxu0 0.0
        %924 = vmatpush1.msra.mxu0 0.0
        %925 = vmatprep.subr.mxu0 0.0
        %926 = vmatpush1.msra.mxu0 0.0
        %927 = vmatprep.subr.mxu0 0.0
        %928 = vmatpush1.msra.mxu0 0.0
        %929 = vmatprep.subr.mxu0 0.0
        %930 = vmatpush1.msra.mxu0 0.0
        %931 = vmatprep.subr.mxu0 0.0
        %932 = vmatpush1.msra.mxu0 0.0
        %933 = vmatprep.subr.mxu0 0.0
        %934 = vmatpush1.msra.mxu0 0.0
        %935 = vmatprep.subr.mxu0 0.0
        %936 = vmatpush1.msra.mxu0 0.0
        %937 = vmatprep.subr.mxu0 0.0
        %938 = vmatpush1.msra.mxu0 0.0
        %939 = vmatprep.subr.mxu0 0.0
        %940 = vmatpush1.msra.mxu0 0.0
        %941 = vmatprep.subr.mxu0 0.0
        %942 = vmatpush1.msra.mxu0 0.0
        %943 = vmatprep.subr.mxu0 0.0
        %944 = vmatpush1.msra.mxu0 0.0
        %945 = vmatprep.subr.mxu0 0.0
        %946 = vmatpush1.msra.mxu0 0.0
        %947 = vmatprep.subr.mxu0 0.0
        %948 = vmatpush1.msra.mxu0 0.0
        %949 = vmatprep.subr.mxu0 0.0
        %950 = vmatpush1.msra.mxu0 0.0
        %951 = vmatprep.subr.mxu0 0.0
        %952 = vmatpush1.msra.mxu0 0.0
        %953 = vmatprep.mubr.f32.mxu0 0.0
        %v954 = vand.u32 %v177, 4294901760
        %955 = vmatmul.mubr.f32.gmra.mrb[0].mxu0 %v954
        %v956 = vpop.f32.mrb[0].mxu0
        %v957 = vadd.f32 %v789, %v956
        %v958 = vpop.f32.mrb[0].mxu0
        %v959 = vadd.f32 %v791, %v958
        %960 = vdwg.mxu0
        %v961 = vand.u32 %v179, 4294901760
        %962 = vmatprep.subr.mxu0 %v961
        %v963 = vand.u32 %v178, 4294901760
        %964 = vmatpush1.msra.mxu0 %v963
        %v965 = vand.u32 %v181, 4294901760
        %966 = vmatprep.subr.mxu0 %v965
        %v967 = vand.u32 %v180, 4294901760
        %968 = vmatpush1.msra.mxu0 %v967
        %v969 = vand.u32 %v183, 4294901760
        %970 = vmatprep.subr.mxu0 %v969
        %v971 = vand.u32 %v182, 4294901760
        %972 = vmatpush1.msra.mxu0 %v971
        %v973 = vand.u32 %v185, 4294901760
        %974 = vmatprep.subr.mxu0 %v973
        %v975 = vand.u32 %v184, 4294901760
        %976 = vmatpush1.msra.mxu0 %v975
        %v977 = vand.u32 %v187, 4294901760
        %978 = vmatprep.subr.mxu0 %v977
        %v979 = vand.u32 %v186, 4294901760
        %980 = vmatpush1.msra.mxu0 %v979
        %v981 = vand.u32 %v189, 4294901760
        %982 = vmatprep.subr.mxu0 %v981
        %v983 = vand.u32 %v188, 4294901760
        %984 = vmatpush1.msra.mxu0 %v983
        %v985 = vand.u32 %v191, 4294901760
        %986 = vmatprep.subr.mxu0 %v985
        %v987 = vand.u32 %v190, 4294901760
        %988 = vmatpush1.msra.mxu0 %v987
        %v989 = vand.u32 %v193, 4294901760
        %990 = vmatprep.subr.mxu0 %v989
        %v991 = vand.u32 %v192, 4294901760
        %992 = vmatpush1.msra.mxu0 %v991
        %v993 = vand.u32 %v195, 4294901760
        %994 = vmatprep.subr.mxu0 %v993
        %v995 = vand.u32 %v194, 4294901760
        %996 = vmatpush1.msra.mxu0 %v995
        %v997 = vand.u32 %v197, 4294901760
        %998 = vmatprep.subr.mxu0 %v997
        %v999 = vand.u32 %v196, 4294901760
        %1000 = vmatpush1.msra.mxu0 %v999
        %v1001 = vand.u32 %v199, 4294901760
        %1002 = vmatprep.subr.mxu0 %v1001
        %v1003 = vand.u32 %v198, 4294901760
        %1004 = vmatpush1.msra.mxu0 %v1003
        %v1005 = vand.u32 %v201, 4294901760
        %1006 = vmatprep.subr.mxu0 %v1005
        %v1007 = vand.u32 %v200, 4294901760
        %1008 = vmatpush1.msra.mxu0 %v1007
        %v1009 = vand.u32 %v203, 4294901760
        %1010 = vmatprep.subr.mxu0 %v1009
        %v1011 = vand.u32 %v202, 4294901760
        %1012 = vmatpush1.msra.mxu0 %v1011
        %v1013 = vand.u32 %v205, 4294901760
        %1014 = vmatprep.subr.mxu0 %v1013
        %v1015 = vand.u32 %v204, 4294901760
        %1016 = vmatpush1.msra.mxu0 %v1015
        %v1017 = vand.u32 %v207, 4294901760
        %1018 = vmatprep.subr.mxu0 %v1017
        %v1019 = vand.u32 %v206, 4294901760
        %1020 = vmatpush1.msra.mxu0 %v1019
        %v1021 = vand.u32 %v209, 4294901760
        %1022 = vmatprep.subr.mxu0 %v1021
        %v1023 = vand.u32 %v208, 4294901760
        %1024 = vmatpush1.msra.mxu0 %v1023
        %1025 = vmatprep.subr.mxu0 0.0
        %1026 = vmatpush1.msra.mxu0 0.0
        %1027 = vmatprep.subr.mxu0 0.0
        %1028 = vmatpush1.msra.mxu0 0.0
        %1029 = vmatprep.subr.mxu0 0.0
        %1030 = vmatpush1.msra.mxu0 0.0
        %1031 = vmatprep.subr.mxu0 0.0
        %1032 = vmatpush1.msra.mxu0 0.0
        %1033 = vmatprep.subr.mxu0 0.0
        %1034 = vmatpush1.msra.mxu0 0.0
        %1035 = vmatprep.subr.mxu0 0.0
        %1036 = vmatpush1.msra.mxu0 0.0
        %1037 = vmatprep.subr.mxu0 0.0
        %1038 = vmatpush1.msra.mxu0 0.0
        %1039 = vmatprep.subr.mxu0 0.0
        %1040 = vmatpush1.msra.mxu0 0.0
        %1041 = vmatprep.subr.mxu0 0.0
        %1042 = vmatpush1.msra.mxu0 0.0
        %1043 = vmatprep.subr.mxu0 0.0
        %1044 = vmatpush1.msra.mxu0 0.0
        %1045 = vmatprep.subr.mxu0 0.0
        %1046 = vmatpush1.msra.mxu0 0.0
        %1047 = vmatprep.subr.mxu0 0.0
        %1048 = vmatpush1.msra.mxu0 0.0
        %1049 = vmatprep.subr.mxu0 0.0
        %1050 = vmatpush1.msra.mxu0 0.0
        %1051 = vmatprep.subr.mxu0 0.0
        %1052 = vmatpush1.msra.mxu0 0.0
        %1053 = vmatprep.subr.mxu0 0.0
        %1054 = vmatpush1.msra.mxu0 0.0
        %1055 = vmatprep.subr.mxu0 0.0
        %1056 = vmatpush1.msra.mxu0 0.0
        %1057 = vmatprep.mubr.f32.mxu0 0.0
        %v1058 = vand.u32 %v177, 4294901760
        %1059 = vmatmul.mubr.f32.gmra.mrb[0].mxu0 %v1058
        %v1060 = vpop.f32.mrb[0].mxu0
        %v1061 = vadd.f32 %v957, %v1060
        %v1062 = vpop.f32.mrb[0].mxu0
        %v1063 = vadd.f32 %v959, %v1062
        %1064 = vdwg.mxu0
        %1065 = vst [vmem:[%s174] sm:$0xff] %v1061
        %1066 = vst [vmem:[%s174 + $0x8] sm:$0xff] %v1063
        %s1067 = sand.u32 %s75, 1
        %s1068 = scalar_lea.sflag [#allocation4], %s1067
        %s1069 = sand.u32 %s75, 1
        %s1070 = smul.addr %s1069, 16
        %s1071 = scalar_lea.vmem [#allocation7], %s1070
        // Predicated region
        $region37: #{tpu_custom_call.1} parent=27 // pred_check
          %p1072 = pneg %p85
        $region38: #{tpu_custom_call.1} parent=27 // pred_check_branch
          %1074 = sbr.rel (%p1072) target = $region40
        $region39: #{tpu_custom_call.1} parent=27 // pred_region
          %s1075 = smul.u32 2, %s20
          %s1077 = ssub.s32 256, 256
          %1078 = vsyncadd %s1068, %s1077
          %s1079 = smul.addr %s1075, 128
          %s1080 = scalar_lea.hbm %s2, %s1079
          %s1082 = sshll.u32 %s1071, 4
          %s1083 = int_to_ptr.vmem [resolvable:$true] %s1082
          %1085 = dma.vmem_to_hbm [thread:$0]  %s1083, 256, %s1080, %s1068
        $region40: #{tpu_custom_call.1} parent=27 // pred_fallthru
          _
      $region28: #{tpu_custom_call.1} parent=5 // pred_fallthru
        _
      %p1086 = scmp.le.s32.totalorder 2, %s15
      // Predicated region
      $region41: #{tpu_custom_call.1} parent=5 // pred_check
        %p1087 = pneg %p1086
      $region42: #{tpu_custom_call.1} parent=5 // pred_check_branch
        %1089 = sbr.rel (%p1087) target = $region44
      $region43: #{tpu_custom_call.1} parent=5 // pred_region
        %s1090 = ssub.s32 %s15, 2
        // Predicated region
        $region45: #{tpu_custom_call.1} parent=43 // pred_check
          %p1091 = pneg %p91
        $region46: #{tpu_custom_call.1} parent=43 // pred_check_branch
          %1093 = sbr.rel (%p1091) target = $region48
        $region47: #{tpu_custom_call.1} parent=43 // pred_region
          %s1094 = sand.u32 %s76, 1
          %s1095 = scalar_lea.sflag [#allocation4], %s1094
          %s1096 = sand.u32 %s76, 1
          %s1097 = smul.addr %s1096, 16
          %s1098 = scalar_lea.vmem [#allocation7], %s1097
          %1099 = dma.done %s1095, 256
        $region48: #{tpu_custom_call.1} parent=43 // pred_fallthru
          _
      $region44: #{tpu_custom_call.1} parent=5 // pred_fallthru
        _
    $region6: #{tpu_custom_call.1} parent=1 // loop_footer
      %s19 = sadd.s32 1, %s15
    $region7: #{tpu_custom_call.1} parent=1 // loop_footer_branch
      %14 = sbr.rel target = $region3
    $region8: #{tpu_custom_call.1} parent=1 // loop_exit
      _
    %1100 = vsyncpa [#allocation3], 1
    %s1101 = scalar_lea.sflag [#allocation3], 1
    %1102 = vsyncpa %s1101, 1
    %1103 = vsyncpa [#allocation6], 1
    %s1104 = scalar_lea.sflag [#allocation6], 1
    %1105 = vsyncpa %s1104, 1
    %1106 = vsyncpa [#allocation4], 1
    %s1107 = scalar_lea.sflag [#allocation4], 1
    %1108 = vsyncpa %s1107, 1

</llo_original>
